<compile_context>
chip_gen: v5e
topology: v5e:2x2
jax: 0.10.0
libtpu: 0.0.40
codegen_flags: <defaults>
</compile_context>

<pallas_src>
import functools

import jax
import jax.numpy as jnp
import numpy as np
from jax.experimental import pallas as pl
from jax.experimental.pallas import tpu as pltpu


_MAX_BR = 256  # kept-axis (sublane) rows per block; multiple of 32 -> any dtype


def _qmean_kernel(x_ref, o_ref, acc_ref, *, inv_k, bk, nk, last_valid):
    """Accumulate row sums of the (BR, bk) block into a (BR, 128) f32 scratch."""
    k = pl.program_id(1)

    @pl.when(k == 0)
    def _():
        acc_ref[...] = jnp.zeros_like(acc_ref)

    full = bk // 128          # number of 128-lane groups in the block
    rem = bk - full * 128     # trailing <128 lanes (only when bk == K, unpadded)

    def accum(valid):
        # `valid` is a trace-time Python int: number of real columns in this
        # block. Groups entirely past `valid` are skipped; the single partial
        # group is lane-masked. All slices are 128-lane aligned -> pure VPU.
        s = None
        for g in range(full):
            lo = g * 128
            if lo >= valid:
                break
            v = x_ref[:, lo:lo + 128].astype(jnp.float32)
            if lo + 128 > valid:
                lane = jax.lax.broadcasted_iota(jnp.int32, v.shape, 1)
                v = jnp.where(lane < (valid - lo), v, 0.0)
            s = v if s is None else s + v
        if s is not None:
            acc_ref[...] += s
        if rem:  # full-extent block (bk == K): tail is real data, no mask
            acc_ref[:, :rem] += x_ref[:, full * 128:].astype(jnp.float32)

    if last_valid == bk:
        # Reduce axis divides evenly (or a single full-extent block): no mask.
        accum(bk)
    else:
        # Only the last reduce block is ragged; keep the hot path mask-free.
        @pl.when(k < nk - 1)
        def _():
            accum(bk)

        @pl.when(k == nk - 1)
        def _():
            accum(last_valid)

    @pl.when(k == nk - 1)
    def _():
        # One cross-lane (XLU) reduce + scale per row block.
        row_sum = jnp.sum(acc_ref[...], axis=-1, keepdims=True)
        o_ref[...] = (row_sum * inv_k).astype(o_ref.dtype)


def _device_kind() -> str:
    try:
        return jax.devices()[0].device_kind.lower()
    except Exception:  # pragma: no cover - e.g. no device at trace time
        return ""


def _target_block_bytes(kind: str) -> int:
    # v6e (1.4 TB/s) / v7x (3.2 TB/s) need ~8 MiB blocks to amortize the
    # ~0.35 us per-step overhead; older / smaller-scoped-VMEM parts (v5e: 16 MiB
    # scoped default) stay at 4 MiB (2 x 4 MiB double-buffered input fits).
    if "v6" in kind or "v7" in kind:
        return 8 << 20
    return 4 << 20


def qmean(x: jax.Array, dim, keepdim: bool = False, *, block_bytes=None) -> jax.Array:
    """Pallas equivalent of torch.mean(x, dim=dim, keepdim=keepdim)."""
    if isinstance(dim, int):
        dim = (dim,)
    ndim = x.ndim
    red = tuple(sorted(d % ndim for d in dim))
    kept = tuple(d for d in range(ndim) if d not in red)

    if not jnp.issubdtype(x.dtype, jnp.floating):
        # torch.mean raises on integer inputs; mirror that instead of silently
        # truncating an f32 accumulation back to int.
        raise TypeError("qmean only supports floating dtypes (as torch.mean does).")

    # Move reduced axes to the end (identity for the NCHW dim=(2,3) case).
    # TODO(synk): for non-trailing reduce dims this transpose materializes a
    # copy in HBM; a layout-native sublane-axis reduction would avoid it.
    perm = kept + red
    x_t = x if perm == tuple(range(ndim)) else jnp.transpose(x, perm)

    kept_shape = tuple(x.shape[d] for d in kept)
    R = int(np.prod(kept_shape, dtype=np.int64))
    K = int(np.prod([x.shape[d] for d in red], dtype=np.int64))
    x2d = x_t.reshape(R, K)

    itemsize = jnp.dtype(x.dtype).itemsize
    kind = _device_kind()
    blk_bytes = int(block_bytes) if block_bytes is not None else _target_block_bytes(kind)
    sub = max(8, 32 // itemsize)  # sublane multiple: 8 (f32) / 16 (bf16) / 32 (i8)

    # --- kept-axis (row / sublane) block ---------------------------------
    if R > _MAX_BR:
        BR = _MAX_BR
    else:
        BR = R
        # v7x has 2 TensorCores: give the "parallel" axis >= 2 blocks when each
        # row carries enough reduction work to be worth the extra grid step.
        if "v7" in kind and R >= 2 * sub and K * itemsize >= (1 << 20):
            BR = ((R + 1) // 2 + sub - 1) // sub * sub

    # --- reduce-axis (lane) block: <= blk_bytes per input block -----------
    bk_cap = max(128, (blk_bytes // (BR * itemsize)) // 128 * 128)
    if K <= bk_cap:
        BK = K                      # full extent: no padding, no tail mask
    else:
        BK = bk_cap                 # multiple of 128; ragged tail masked in-kernel

    grid = (pl.cdiv(R, BR), pl.cdiv(K, BK))
    nk = grid[1]
    last_valid = K - (nk - 1) * BK  # columns in the last reduce block (1..BK)
    inv_k = 1.0 / float(K)

    out2d = pl.pallas_call(
        functools.partial(_qmean_kernel, inv_k=inv_k, bk=BK, nk=nk,
                          last_valid=last_valid),
        out_shape=jax.ShapeDtypeStruct((R, 1), x.dtype),
        grid_spec=pltpu.PrefetchScalarGridSpec(
            num_scalar_prefetch=0,
            grid=grid,
            in_specs=[pl.BlockSpec((BR, BK), lambda i, k: (i, k))],
            out_specs=pl.BlockSpec((BR, 1), lambda i, k: (i, 0)),
            scratch_shapes=[pltpu.VMEM((BR, 128), jnp.float32)],
        ),
        compiler_params=pltpu.CompilerParams(
            dimension_semantics=("parallel", "arbitrary"),
            vmem_limit_bytes=int(min(48 << 20, 2 * BR * BK * itemsize + (16 << 20))),
        ),
        cost_estimate=pl.CostEstimate(
            flops=R * K,
            transcendentals=0,
            bytes_accessed=R * K * itemsize + R * itemsize,
        ),
    )(x2d)

    res = out2d.reshape(kept_shape)
    if keepdim:
        res = jnp.expand_dims(res, red)
    return res


class QMean:
    """Mirror of sparsebit QMean: mean over fixed dims read from the fx node."""

    def __init__(self, dim, keepdim: bool = False):
        self.dim = dim
        self.keepdim = keepdim
        # TODO(synk): input_quantizer (fake-quant) is identity when disabled; no
        # quantization is applied here.

    def __call__(self, x: jax.Array) -> jax.Array:
        return qmean(x, self.dim, self.keepdim)


if __name__ == "__main__":
    key = jax.random.PRNGKey(0)
    k1, k2, k3, k4 = jax.random.split(key, 4)

    # 1) Classic traced pattern: NCHW global average pool (dim=(2,3), keepdim).
    x1 = jax.random.normal(k1, (2, 4, 16, 16), dtype=jnp.float32)
    y1 = QMean(dim=(2, 3), keepdim=True)(x1)
    jax.block_until_ready(y1)
    r1 = jnp.mean(x1, axis=(2, 3), keepdims=True)
    assert y1.shape == r1.shape and y1.dtype == r1.dtype
    assert bool(jnp.allclose(y1, r1, atol=1e-5, rtol=1e-5))

    # 2) Reduce extent not a multiple of 128 (exercises the <128-lane tail path).
    x2 = jax.random.normal(k2, (3, 5, 10, 10), dtype=jnp.float32)
    y2 = QMean(dim=(2, 3), keepdim=False)(x2)
    r2 = jnp.mean(x2, axis=(2, 3))
    assert y2.shape == r2.shape
    assert bool(jnp.allclose(y2, r2, atol=1e-5, rtol=1e-5))

    # 3) Ragged row grid (R % BR != 0) with no host-side padding.
    x3 = jax.random.normal(k3, (520, 1, 8, 8), dtype=jnp.float32)
    y3 = QMean(dim=(2, 3), keepdim=True)(x3)
    r3 = jnp.mean(x3, axis=(2, 3), keepdims=True)
    assert bool(jnp.allclose(y3, r3, atol=1e-5, rtol=1e-5))

    # 4) Force K-tiling + ragged-tail mask via a tiny block budget.
    x4 = jax.random.normal(k4, (2, 4, 16, 33), dtype=jnp.float32)
    y4 = qmean(x4, dim=(2, 3), keepdim=True, block_bytes=8 * 1024)
    r4 = jnp.mean(x4, axis=(2, 3), keepdims=True)
    assert bool(jnp.allclose(y4, r4, atol=1e-5, rtol=1e-5))

    print("KERNEL_OK")
</pallas_src>

<mosaic_0001>
module attributes {stable_mosaic.version = 11 : i64} {
  func.func @_qmean_kernel(%arg0: i32, %arg1: i32, %arg2: memref<8x256xf32, #tpu.memory_space<vmem>>, %arg3: memref<8x1xf32, #tpu.memory_space<vmem>>, %arg4: memref<8x128xf32, #tpu.memory_space<vmem>>) attributes {dimension_semantics = [#tpu.dimension_semantics<parallel>, #tpu.dimension_semantics<arbitrary>], iteration_bounds = array<i64: 1, 1>, scalar_prefetch = 0 : i64, scratch_operands = 1 : i64, tpu.core_type = #tpu.core_type<tc>, window_params = [{transform_indices = @transform_0, window_bounds = array<i64: 8, 256>}, {transform_indices = @transform_1, window_bounds = array<i64: 8, 1>}]} {
    %c0_i32 = arith.constant 0 : i32
    %0 = arith.cmpi eq, %arg1, %c0_i32 : i32
    %1 = arith.extui %0 : i1 to i32
    %c0_i32_0 = arith.constant 0 : i32
    %2 = arith.cmpi ne, %1, %c0_i32_0 : i32
    scf.if %2 {
      %cst = arith.constant 0.000000e+00 : f32
      %12 = vector.broadcast %cst : f32 to vector<8x128xf32>
      %c0_9 = arith.constant 0 : index
      %c0_10 = arith.constant 0 : index
      %13 = vector.load %arg4[%c0_9, %c0_10] : memref<8x128xf32, #tpu.memory_space<vmem>>, vector<8x128xf32>
      tpu.vector_store %arg4[%c0_9, %c0_10], %12 {strides = array<i32>} : memref<8x128xf32, #tpu.memory_space<vmem>>, vector<8x128xf32>,
    } else {
    }
    %c0 = arith.constant 0 : index
    %c0_1 = arith.constant 0 : index
    %3 = vector.load %arg2[%c0, %c0_1] : memref<8x256xf32, #tpu.memory_space<vmem>>, vector<8x128xf32>
    %c0_2 = arith.constant 0 : index
    %c128 = arith.constant 128 : index
    %4 = vector.load %arg2[%c0_2, %c128] : memref<8x256xf32, #tpu.memory_space<vmem>>, vector<8x128xf32>
    %5 = arith.addf %3, %4 : vector<8x128xf32>
    %c0_3 = arith.constant 0 : index
    %c0_4 = arith.constant 0 : index
    %6 = vector.load %arg4[%c0_3, %c0_4] : memref<8x128xf32, #tpu.memory_space<vmem>>, vector<8x128xf32>
    %7 = arith.addf %6, %5 : vector<8x128xf32>
    %c0_5 = arith.constant 0 : index
    %c0_6 = arith.constant 0 : index
    %8 = vector.load %arg4[%c0_5, %c0_6] : memref<8x128xf32, #tpu.memory_space<vmem>>, vector<8x128xf32>
    tpu.vector_store %arg4[%c0_5, %c0_6], %7 {strides = array<i32>} : memref<8x128xf32, #tpu.memory_space<vmem>>, vector<8x128xf32>,
    %c0_i32_7 = arith.constant 0 : i32
    %9 = arith.cmpi eq, %arg1, %c0_i32_7 : i32
    %10 = arith.extui %9 : i1 to i32
    %c0_i32_8 = arith.constant 0 : i32
    %11 = arith.cmpi ne, %10, %c0_i32_8 : i32
    scf.if %11 {
      %c0_9 = arith.constant 0 : index
      %c0_10 = arith.constant 0 : index
      %12 = vector.load %arg4[%c0_9, %c0_10] : memref<8x128xf32, #tpu.memory_space<vmem>>, vector<8x128xf32>
      %cst = arith.constant dense<0.000000e+00> : vector<8xf32>
      %13 = vector.multi_reduction <add>, %12, %cst [1] : vector<8x128xf32> to vector<8xf32>
      %14 = vector.shape_cast %13 : vector<8xf32> to vector<8x1xf32>
      %cst_11 = arith.constant 3.906250e-03 : f32
      %15 = vector.broadcast %cst_11 : f32 to vector<8x1xf32>
      %16 = arith.mulf %14, %15 : vector<8x1xf32>
      %c0_12 = arith.constant 0 : index
      %c0_13 = arith.constant 0 : index
      %17 = vector.load %arg3[%c0_12, %c0_13] : memref<8x1xf32, #tpu.memory_space<vmem>>, vector<8x1xf32>
      tpu.vector_store %arg3[%c0_12, %c0_13], %16 {strides = array<i32>} : memref<8x1xf32, #tpu.memory_space<vmem>>, vector<8x1xf32>,
    } else {
    }
    return
  }
  func.func @transform_0(%arg0: i32, %arg1: i32) -> (i32, i32) {
    %c0_i32 = arith.constant 0 : i32
    return %arg0, %arg1 : i32, i32
  }
  func.func @transform_1(%arg0: i32, %arg1: i32) -> (i32, i32) {
    %c0_i32 = arith.constant 0 : i32
    %c0_i32_0 = arith.constant 0 : i32
    return %arg0, %c0_i32 : i32, i32
  }
}

</mosaic_0001>

<llo_original>
// kernel: tpu_custom_call.1
$region0: #{tpu_custom_call.1}
  #allocation0 [shape = 'u32[]', space=smem, size = 0x4, offset = 0x4, fixed_abs, tag = 'smem constant byte address 0x4 - core index']
  #allocation1 [shape = 'u32[72,128]{1,0:T(1,128)}', space=vmem, size = 0x9000, scoped, tag = 'internal scratch']
  #allocation2 [shape = 'f32[8,128]{1,0:T(8,128)}', space=vmem, size = 0x1000, scoped, tag = 'scratch operand']
  %s0 = inlined_call_operand.hbm [shape: f32[8,256], index: 0, kind: input, shape index: {}]
  %s1 = inlined_call_operand.vmem [shape: f32[8,1], index: 1, kind: output, shape index: {}]
  %s2 = sld [smem:[#allocation0]]
  $region26: #{tpu_custom_call.1} parent=0
    _
  %s4 = ssub.s32 1, %s2
  %s5 = scalar_select 0, %s4, %s2
  $region1: #{tpu_custom_call.1} parent=0
    #allocation3 [shape = 'u8[8192]{0}', space=vmem, size = 0x2000, scoped, tag = 'input window, operand 0, single buffered']
    #allocation4 [shape = 's32[1]{0}', space=sflag, size = 0x4, scoped, tag = 'scoped memory for tpu_custom_call.1']
    %6 = vsyncpa [#allocation4], 0
    // Predicated region
    $region2: #{tpu_custom_call.1} parent=1 // pred_check
      _
    $region3: #{tpu_custom_call.1} parent=1 // pred_check_branch
      %8 = sbr.rel (0) target = $region5
    $region4: #{tpu_custom_call.1} parent=1 // pred_region
      %10 = vsyncadd [#allocation4], 0
      %s12 = sshll.u32 %s0, 4
      %s13 = int_to_ptr.hbm [resolvable:$true] %s12
      %s14 = sshll.u32 [#allocation3], 4
      %s15 = int_to_ptr.vmem [resolvable:$true] %s14
      %17 = dma.hbm_to_vmem [thread:$0]  %s13, 256, %s15, [#allocation4]
    $region5: #{tpu_custom_call.1} parent=1 // pred_fallthru
      _
    // Predicated region
    $region6: #{tpu_custom_call.1} parent=1 // pred_check
      _
    $region7: #{tpu_custom_call.1} parent=1 // pred_check_branch
      %19 = sbr.rel (0) target = $region9
    $region8: #{tpu_custom_call.1} parent=1 // pred_region
      %21 = dma.done [#allocation4], 256
    $region9: #{tpu_custom_call.1} parent=1 // pred_fallthru
      _
    %p22 = scmp.eq.s32.totalorder 0, 0
    // Predicated region
    $region10: #{tpu_custom_call.1} parent=1 // pred_check
      %p23 = pneg %p22
    $region11: #{tpu_custom_call.1} parent=1 // pred_check_branch
      %25 = sbr.rel (%p23) target = $region13
    $region12: #{tpu_custom_call.1} parent=1 // pred_region
      %26 = vst [vmem:[#allocation2] sm:$0xff] 0.0
    $region13: #{tpu_custom_call.1} parent=1 // pred_fallthru
      _
    %v27 = vld [vmem:[#allocation3] sm:$0xff]
    %v28 = vld [vmem:[#allocation3 + $0x8] sm:$0xff]
    %v29 = vadd.f32 %v27, %v28
    %v30 = vld [vmem:[#allocation2] sm:$0xff]
    %v31 = vadd.f32 %v30, %v29
    %32 = vst [vmem:[#allocation2] sm:$0xff] %v31
    // Predicated region
    $region14: #{tpu_custom_call.1} parent=1 // pred_check
      %p33 = pneg %p22
    $region15: #{tpu_custom_call.1} parent=1 // pred_check_branch
      %35 = sbr.rel (%p33) target = $region17
    $region16: #{tpu_custom_call.1} parent=1 // pred_region
      %v36 = vld [vmem:[#allocation2] sm:$0xff]
      %37 = vadd.xlane.f32.xlu0 %v36
      %v38 = vpop.xlane.xlu0 %37
      %v39 = vmul.f32 %v38, 0.00390625
      %vm40 = vcmask 7168
      %41 = vst.msk [vmem:[%s1] sm:$0xff] %vm40, %v39
    $region17: #{tpu_custom_call.1} parent=1 // pred_fallthru
      _
    // Predicated region
    $region18: #{tpu_custom_call.1} parent=1 // pred_check
      _
    $region19: #{tpu_custom_call.1} parent=1 // pred_check_branch
      %43 = sbr.rel (0) target = $region21
    $region20: #{tpu_custom_call.1} parent=1 // pred_region
      _
    $region21: #{tpu_custom_call.1} parent=1 // pred_fallthru
      _
    // Predicated region
    $region22: #{tpu_custom_call.1} parent=1 // pred_check
      _
    $region23: #{tpu_custom_call.1} parent=1 // pred_check_branch
      %45 = sbr.rel (0) target = $region25
    $region24: #{tpu_custom_call.1} parent=1 // pred_region
      _
    $region25: #{tpu_custom_call.1} parent=1 // pred_fallthru
      _
    %46 = vsyncpa [#allocation4], 1

</llo_original>
